<compile_context>
chip_gen: v6e
topology: v6e:2x2x1
jax: 0.10.0
libtpu: 0.0.40
codegen_flags: <defaults>
</compile_context>

<pallas_src>
import jax
import jax.numpy as jnp
from jax.experimental import pallas as pl
from jax.experimental.pallas import tpu as pltpu


def _round_up(x, m):
    return ((x + m - 1) // m) * m


def _make_kernel(TB, C, B, is_va):
    """Per-tile kernel: CE(logits_all), CE(logits_q), [CE(logits_v)], KL."""

    def kernel(cid_ref, *refs):
        if is_va:
            la_ref, lq_ref, lv_ref, nde_ref, out_ref = refs
        else:
            la_ref, lq_ref, nde_ref, out_ref = refs

        i = pl.program_id(0)
        start = pl.multiple_of(i * TB, 8)
        labels = cid_ref[pl.ds(start, TB), :]                 # (TB, 1) int32

        la = la_ref[...].astype(jnp.float32)                  # (TB, C)
        lq = lq_ref[...].astype(jnp.float32)
        nde = nde_ref[...].astype(jnp.float32)

        col = jax.lax.broadcasted_iota(jnp.int32, (TB, C), 1)
        label_mask = col == labels                            # in-kernel one-hot

        row = jax.lax.broadcasted_iota(jnp.int32, (TB, 1), 0) + i * TB
        row_valid = row < B                                   # (TB, 1) bool

        def ce_rows(logits):
            m = jnp.max(logits, axis=-1, keepdims=True)
            lse = jnp.log(jnp.sum(jnp.exp(logits - m), axis=-1,
                                  keepdims=True)) + m
            picked = jnp.sum(jnp.where(label_mask, logits, 0.0),
                             axis=-1, keepdims=True)
            # where (not multiply): tail-block rows may contain undefined data.
            return jnp.where(row_valid, lse - picked, 0.0)    # (TB, 1)

        # logits_all: softmax stats computed once, shared by CE and KL.
        m_te = jnp.max(la, axis=-1, keepdims=True)
        e_te = jnp.exp(la - m_te)
        sum_te = jnp.sum(e_te, axis=-1, keepdims=True)
        lse_te = jnp.log(sum_te) + m_te
        picked_te = jnp.sum(jnp.where(label_mask, la, 0.0),
                            axis=-1, keepdims=True)
        fusion_rows = jnp.where(row_valid, lse_te - picked_te, 0.0)

        p_te = e_te * pl.reciprocal(sum_te)                   # softmax(logits_all)

        m_nde = jnp.max(nde, axis=-1, keepdims=True)
        sh = nde - m_nde
        log_p_nde = sh - jnp.log(jnp.sum(jnp.exp(sh), axis=-1, keepdims=True))
        kl_rows = jnp.where(
            row_valid,
            jnp.sum(-p_te * log_p_nde, axis=-1, keepdims=True),
            0.0)

        question_rows = ce_rows(lq)

        # Per-tile partial sums packed into one lane-dense (1, 128) row:
        #   lane 0 = fusion, 1 = question, 2 = vision, 3 = kl.
        f_p = jnp.sum(fusion_rows, axis=0, keepdims=True)     # (1, 1)
        q_p = jnp.sum(question_rows, axis=0, keepdims=True)
        k_p = jnp.sum(kl_rows, axis=0, keepdims=True)

        lane = jax.lax.broadcasted_iota(jnp.int32, (1, 128), 1)
        row_out = (jnp.where(lane == 0, f_p, 0.0)
                   + jnp.where(lane == 1, q_p, 0.0)
                   + jnp.where(lane == 3, k_p, 0.0))
        if is_va:
            lv = lv_ref[...].astype(jnp.float32)
            v_p = jnp.sum(ce_rows(lv), axis=0, keepdims=True)
            row_out = row_out + jnp.where(lane == 2, v_p, 0.0)

        out_ref[0] = row_out                                  # (1, 128) store

    return kernel


def pwvqa_criterion(net_out, batch, *, question_loss_weight=1.0,
                    vision_loss_weight=1.0, is_va=True, block_b=None,
                    vmem_stream_budget_bytes=10 * 1024 * 1024):
    """JAX/Pallas equivalent of PWVQACriterion.forward (forward only)."""
    class_id = jnp.squeeze(batch["class_id"], axis=1).astype(jnp.int32)  # (B,)
    logits_all = net_out["logits_all"]
    logits_q = net_out["logits_q"]
    z_nde = net_out["z_nde"]

    streams = [logits_all, logits_q]
    if is_va:
        streams.append(net_out["logits_v"])
    streams.append(z_nde)
    n_streams = len(streams)                                  # 4 or 3

    B, C = logits_all.shape
    C_lanes = _round_up(C, 128)                               # VMEM layout padding only
    itemsize = max(jnp.dtype(s.dtype).itemsize for s in streams)

    # Batch tile: fill the VMEM budget (double-buffered streams), multiple of 8.
    if block_b is not None:
        TB = max(8, _round_up(block_b, 8))
    else:
        bytes_per_row = n_streams * 2 * C_lanes * itemsize
        TB = vmem_stream_budget_bytes // max(bytes_per_row, 1)
        TB = max(8, min(512, (TB // 8) * 8))
    TB = min(TB, max(8, _round_up(B, 8)))
    num_tiles = (B + TB - 1) // TB
    B_cid = num_tiles * TB

    # Labels: tiny int32 column, padded to the grid extent, grid-resident.
    cid_p = jnp.pad(class_id, (0, B_cid - B))[:, None]        # (B_cid, 1)

    # Explicit VMEM limit from the actual working set.
    stream_vmem = n_streams * 2 * TB * C_lanes * itemsize     # double-buffered tiles
    cid_vmem = 2 * B_cid * 128 * 4                            # resident labels (lane-padded)
    out_vmem = 2 * 8 * 128 * 4
    vmem_limit = int(min(max(stream_vmem + cid_vmem + out_vmem + (2 << 20),
                             16 * 1024 * 1024),
                         48 * 1024 * 1024))

    logit_spec = pl.BlockSpec((TB, C), lambda i: (i, 0))      # full class dim, no pad
    in_specs = ([pl.BlockSpec((B_cid, 1), lambda i: (0, 0))]  # labels, DMA'd once
                + [logit_spec] * n_streams)

    partials = pl.pallas_call(
        _make_kernel(TB, C, B, is_va),
        out_shape=jax.ShapeDtypeStruct((num_tiles, 1, 128), jnp.float32),
        grid_spec=pltpu.PrefetchScalarGridSpec(
            num_scalar_prefetch=0,
            grid=(num_tiles,),
            in_specs=in_specs,
            out_specs=pl.BlockSpec((1, 1, 128), lambda i: (i, 0, 0)),
        ),
        compiler_params=pltpu.CompilerParams(
            dimension_semantics=("parallel",),                # megacore on v7x
            vmem_limit_bytes=vmem_limit),
    )(cid_p, *streams)

    # Tiny epilogue in the wrapper: sum per-tile partials, scale by 1/B, weight.
    sums = jnp.sum(partials[:, 0, :], axis=0) / B             # (128,)
    fusion, question, vision, kl = sums[0], sums[1], sums[2], sums[3]

    loss = fusion + question_loss_weight * question + kl
    out = {"loss": loss, "loss_mm_q": fusion, "loss_q": question}
    if is_va:
        loss = loss + vision_loss_weight * vision
        out["loss"] = loss
        out["loss_v"] = vision
    return out


def _reference(net_out, batch, *, question_loss_weight=1.0,
               vision_loss_weight=1.0, is_va=True):
    """Pure-JAX reference for a sanity check."""
    class_id = jnp.squeeze(batch["class_id"], axis=1)

    def ce(logits):
        logp = jax.nn.log_softmax(logits.astype(jnp.float32), axis=-1)
        return -jnp.mean(jnp.take_along_axis(logp, class_id[:, None], axis=1))

    fusion = ce(net_out["logits_all"])
    question = ce(net_out["logits_q"])
    p_te = jax.nn.softmax(net_out["logits_all"].astype(jnp.float32), axis=-1)
    log_p_nde = jax.nn.log_softmax(net_out["z_nde"].astype(jnp.float32), axis=-1)
    kl = jnp.mean(jnp.sum(-p_te * log_p_nde, axis=-1))
    loss = fusion + question_loss_weight * question + kl
    out = {"loss": loss, "loss_mm_q": fusion, "loss_q": question}
    if is_va:
        vision = ce(net_out["logits_v"])
        loss = loss + vision_loss_weight * vision
        out["loss"] = loss
        out["loss_v"] = vision
    return out


if __name__ == "__main__":
    key = jax.random.PRNGKey(0)
    B, C = 20, 50          # deliberately ragged: C % 128 != 0, B % TB != 0
    k1, k2, k3, k4, k5 = jax.random.split(key, 5)

    net_out = {
        "logits_all": jax.random.normal(k1, (B, C), dtype=jnp.float32),
        "logits_q": jax.random.normal(k2, (B, C), dtype=jnp.float32),
        "logits_v": jax.random.normal(k3, (B, C), dtype=jnp.float32),
        "z_nde": jax.random.normal(k4, (B, C), dtype=jnp.float32),
    }
    batch = {"class_id": jax.random.randint(k5, (B, 1), 0, C, dtype=jnp.int32)}

    # is_va=True, small tile so the grid has 3 steps incl. a partial tail tile.
    out = pwvqa_criterion(net_out, batch, block_b=8)
    out = jax.tree_util.tree_map(jax.block_until_ready, out)
    ref = _reference(net_out, batch)
    for name in ("loss", "loss_mm_q", "loss_q", "loss_v"):
        assert jnp.allclose(out[name], ref[name], atol=1e-5, rtol=1e-5), (
            f"mismatch for {name}: {out[name]} vs {ref[name]}")

    # is_va=False path: logits_v is never DMA'd and no vision CE is computed.
    out_nv = pwvqa_criterion(net_out, batch, is_va=False)
    out_nv = jax.tree_util.tree_map(jax.block_until_ready, out_nv)
    ref_nv = _reference(net_out, batch, is_va=False)
    for name in ("loss", "loss_mm_q", "loss_q"):
        assert jnp.allclose(out_nv[name], ref_nv[name], atol=1e-5, rtol=1e-5), (
            f"mismatch for {name} (is_va=False): {out_nv[name]} vs {ref_nv[name]}")

    print("KERNEL_OK")
</pallas_src>

<mosaic_0001>
module attributes {stable_mosaic.version = 11 : i64} {
  func.func @kernel(%arg0: i32, %arg1: memref<24x1xi32, #tpu.memory_space<vmem>>, %arg2: memref<8x50xf32, #tpu.memory_space<vmem>>, %arg3: memref<8x50xf32, #tpu.memory_space<vmem>>, %arg4: memref<8x50xf32, #tpu.memory_space<vmem>>, %arg5: memref<8x50xf32, #tpu.memory_space<vmem>>, %arg6: memref<1x1x128xf32, #tpu.memory_space<vmem>>) attributes {dimension_semantics = [#tpu.dimension_semantics<parallel>], iteration_bounds = array<i64: 3>, scalar_prefetch = 0 : i64, scratch_operands = 0 : i64, tpu.core_type = #tpu.core_type<tc>, window_params = [{pipeline_mode = #tpu.pipeline_mode<synchronous>, transform_indices = @transform_0, window_bounds = array<i64: 24, 1>}, {transform_indices = @transform_1, window_bounds = array<i64: 8, 50>}, {transform_indices = @transform_2, window_bounds = array<i64: 8, 50>}, {transform_indices = @transform_3, window_bounds = array<i64: 8, 50>}, {transform_indices = @transform_4, window_bounds = array<i64: 8, 50>}, {transform_indices = @transform_5, window_bounds = array<i64: 1, 1, 128>}]} {
    %c8_i32 = arith.constant 8 : i32
    %0 = arith.muli %arg0, %c8_i32 : i32
    %1 = tpu.assume_multiple %0, 8 : i32
    %2 = arith.index_cast %1 : i32 to index
    %c0 = arith.constant 0 : index
    %3 = vector.load %arg1[%2, %c0] : memref<24x1xi32, #tpu.memory_space<vmem>>, vector<8x1xi32>
    %c0_0 = arith.constant 0 : index
    %c0_1 = arith.constant 0 : index
    %4 = vector.load %arg2[%c0_0, %c0_1] : memref<8x50xf32, #tpu.memory_space<vmem>>, vector<8x50xf32>
    %c0_2 = arith.constant 0 : index
    %c0_3 = arith.constant 0 : index
    %5 = vector.load %arg3[%c0_2, %c0_3] : memref<8x50xf32, #tpu.memory_space<vmem>>, vector<8x50xf32>
    %c0_4 = arith.constant 0 : index
    %c0_5 = arith.constant 0 : index
    %6 = vector.load %arg5[%c0_4, %c0_5] : memref<8x50xf32, #tpu.memory_space<vmem>>, vector<8x50xf32>
    %7 = tpu.iota {dimensions = array<i32: 1>} : vector<8x50xi32>
    %8 = vector.broadcast %3 : vector<8x1xi32> to vector<8x50xi32>
    %9 = arith.cmpi eq, %7, %8 : vector<8x50xi32>
    %10 = tpu.iota {dimensions = array<i32: 0>} : vector<8x1xi32>
    %c8_i32_6 = arith.constant 8 : i32
    %11 = arith.muli %arg0, %c8_i32_6 : i32
    %12 = vector.broadcast %11 : i32 to vector<8x1xi32>
    %13 = arith.addi %10, %12 : vector<8x1xi32>
    %c20_i32 = arith.constant 20 : i32
    %14 = vector.broadcast %c20_i32 : i32 to vector<8x1xi32>
    %15 = arith.cmpi slt, %13, %14 : vector<8x1xi32>
    %cst = arith.constant dense<0xFF800000> : vector<8xf32>
    %16 = vector.multi_reduction <maximumf>, %4, %cst [1] : vector<8x50xf32> to vector<8xf32>
    %17 = vector.shape_cast %16 : vector<8xf32> to vector<8x1xf32>
    %18 = vector.broadcast %17 : vector<8x1xf32> to vector<8x50xf32>
    %19 = arith.subf %4, %18 : vector<8x50xf32>
    %20 = math.exp %19 : vector<8x50xf32>
    %cst_7 = arith.constant dense<0.000000e+00> : vector<8xf32>
    %21 = vector.multi_reduction <add>, %20, %cst_7 [1] : vector<8x50xf32> to vector<8xf32>
    %22 = vector.shape_cast %21 : vector<8xf32> to vector<8x1xf32>
    %23 = math.log %22 : vector<8x1xf32>
    %24 = arith.addf %23, %17 : vector<8x1xf32>
    %cst_8 = arith.constant 0.000000e+00 : f32
    %25 = vector.broadcast %cst_8 : f32 to vector<8x50xf32>
    %26 = arith.select %9, %4, %25 : vector<8x50xi1>, vector<8x50xf32>
    %cst_9 = arith.constant dense<0.000000e+00> : vector<8xf32>
    %27 = vector.multi_reduction <add>, %26, %cst_9 [1] : vector<8x50xf32> to vector<8xf32>
    %28 = vector.shape_cast %27 : vector<8xf32> to vector<8x1xf32>
    %29 = arith.subf %24, %28 : vector<8x1xf32>
    %cst_10 = arith.constant 0.000000e+00 : f32
    %30 = vector.broadcast %cst_10 : f32 to vector<8x1xf32>
    %31 = arith.select %15, %29, %30 : vector<8x1xi1>, vector<8x1xf32>
    %32 = tpu.reciprocal %22 : vector<8x1xf32> -> vector<8x1xf32>
    %33 = vector.broadcast %32 : vector<8x1xf32> to vector<8x50xf32>
    %34 = arith.mulf %20, %33 : vector<8x50xf32>
    %cst_11 = arith.constant dense<0xFF800000> : vector<8xf32>
    %35 = vector.multi_reduction <maximumf>, %6, %cst_11 [1] : vector<8x50xf32> to vector<8xf32>
    %36 = vector.shape_cast %35 : vector<8xf32> to vector<8x1xf32>
    %37 = vector.broadcast %36 : vector<8x1xf32> to vector<8x50xf32>
    %38 = arith.subf %6, %37 : vector<8x50xf32>
    %39 = math.exp %38 : vector<8x50xf32>
    %cst_12 = arith.constant dense<0.000000e+00> : vector<8xf32>
    %40 = vector.multi_reduction <add>, %39, %cst_12 [1] : vector<8x50xf32> to vector<8xf32>
    %41 = vector.shape_cast %40 : vector<8xf32> to vector<8x1xf32>
    %42 = math.log %41 : vector<8x1xf32>
    %43 = vector.broadcast %42 : vector<8x1xf32> to vector<8x50xf32>
    %44 = arith.subf %38, %43 : vector<8x50xf32>
    %cst_13 = arith.constant 0.000000e+00 : f32
    %45 = vector.broadcast %cst_13 : f32 to vector<8x50xf32>
    %46 = arith.subf %45, %34 : vector<8x50xf32>
    %47 = arith.mulf %46, %44 : vector<8x50xf32>
    %cst_14 = arith.constant dense<0.000000e+00> : vector<8xf32>
    %48 = vector.multi_reduction <add>, %47, %cst_14 [1] : vector<8x50xf32> to vector<8xf32>
    %49 = vector.shape_cast %48 : vector<8xf32> to vector<8x1xf32>
    %cst_15 = arith.constant 0.000000e+00 : f32
    %50 = vector.broadcast %cst_15 : f32 to vector<8x1xf32>
    %51 = arith.select %15, %49, %50 : vector<8x1xi1>, vector<8x1xf32>
    %cst_16 = arith.constant dense<0xFF800000> : vector<8xf32>
    %52 = vector.multi_reduction <maximumf>, %5, %cst_16 [1] : vector<8x50xf32> to vector<8xf32>
    %53 = vector.shape_cast %52 : vector<8xf32> to vector<8x1xf32>
    %54 = vector.broadcast %53 : vector<8x1xf32> to vector<8x50xf32>
    %55 = arith.subf %5, %54 : vector<8x50xf32>
    %56 = math.exp %55 : vector<8x50xf32>
    %cst_17 = arith.constant dense<0.000000e+00> : vector<8xf32>
    %57 = vector.multi_reduction <add>, %56, %cst_17 [1] : vector<8x50xf32> to vector<8xf32>
    %58 = vector.shape_cast %57 : vector<8xf32> to vector<8x1xf32>
    %59 = math.log %58 : vector<8x1xf32>
    %60 = arith.addf %59, %53 : vector<8x1xf32>
    %cst_18 = arith.constant 0.000000e+00 : f32
    %61 = vector.broadcast %cst_18 : f32 to vector<8x50xf32>
    %62 = arith.select %9, %5, %61 : vector<8x50xi1>, vector<8x50xf32>
    %cst_19 = arith.constant dense<0.000000e+00> : vector<8xf32>
    %63 = vector.multi_reduction <add>, %62, %cst_19 [1] : vector<8x50xf32> to vector<8xf32>
    %64 = vector.shape_cast %63 : vector<8xf32> to vector<8x1xf32>
    %65 = arith.subf %60, %64 : vector<8x1xf32>
    %cst_20 = arith.constant 0.000000e+00 : f32
    %66 = vector.broadcast %cst_20 : f32 to vector<8x1xf32>
    %67 = arith.select %15, %65, %66 : vector<8x1xi1>, vector<8x1xf32>
    %cst_21 = arith.constant dense<0.000000e+00> : vector<1xf32>
    %68 = vector.multi_reduction <add>, %31, %cst_21 [0] : vector<8x1xf32> to vector<1xf32>
    %69 = vector.shape_cast %68 : vector<1xf32> to vector<1x1xf32>
    %cst_22 = arith.constant dense<0.000000e+00> : vector<1xf32>
    %70 = vector.multi_reduction <add>, %67, %cst_22 [0] : vector<8x1xf32> to vector<1xf32>
    %71 = vector.shape_cast %70 : vector<1xf32> to vector<1x1xf32>
    %cst_23 = arith.constant dense<0.000000e+00> : vector<1xf32>
    %72 = vector.multi_reduction <add>, %51, %cst_23 [0] : vector<8x1xf32> to vector<1xf32>
    %73 = vector.shape_cast %72 : vector<1xf32> to vector<1x1xf32>
    %74 = tpu.iota {dimensions = array<i32: 1>} : vector<1x128xi32>
    %c0_i32 = arith.constant 0 : i32
    %75 = vector.broadcast %c0_i32 : i32 to vector<1x128xi32>
    %76 = arith.cmpi eq, %74, %75 : vector<1x128xi32>
    %cst_24 = arith.constant 0.000000e+00 : f32
    %77 = vector.shape_cast %69 : vector<1x1xf32> to vector<1x1xf32>
    %78 = vector.broadcast %77 : vector<1x1xf32> to vector<1x128xf32>
    %79 = vector.broadcast %cst_24 : f32 to vector<1x128xf32>
    %80 = arith.select %76, %78, %79 : vector<1x128xi1>, vector<1x128xf32>
    %c1_i32 = arith.constant 1 : i32
    %81 = vector.broadcast %c1_i32 : i32 to vector<1x128xi32>
    %82 = arith.cmpi eq, %74, %81 : vector<1x128xi32>
    %cst_25 = arith.constant 0.000000e+00 : f32
    %83 = vector.shape_cast %71 : vector<1x1xf32> to vector<1x1xf32>
    %84 = vector.broadcast %83 : vector<1x1xf32> to vector<1x128xf32>
    %85 = vector.broadcast %cst_25 : f32 to vector<1x128xf32>
    %86 = arith.select %82, %84, %85 : vector<1x128xi1>, vector<1x128xf32>
    %87 = arith.addf %80, %86 : vector<1x128xf32>
    %c3_i32 = arith.constant 3 : i32
    %88 = vector.broadcast %c3_i32 : i32 to vector<1x128xi32>
    %89 = arith.cmpi eq, %74, %88 : vector<1x128xi32>
    %cst_26 = arith.constant 0.000000e+00 : f32
    %90 = vector.shape_cast %73 : vector<1x1xf32> to vector<1x1xf32>
    %91 = vector.broadcast %90 : vector<1x1xf32> to vector<1x128xf32>
    %92 = vector.broadcast %cst_26 : f32 to vector<1x128xf32>
    %93 = arith.select %89, %91, %92 : vector<1x128xi1>, vector<1x128xf32>
    %94 = arith.addf %87, %93 : vector<1x128xf32>
    %c0_27 = arith.constant 0 : index
    %c0_28 = arith.constant 0 : index
    %95 = vector.load %arg4[%c0_27, %c0_28] : memref<8x50xf32, #tpu.memory_space<vmem>>, vector<8x50xf32>
    %cst_29 = arith.constant dense<0xFF800000> : vector<8xf32>
    %96 = vector.multi_reduction <maximumf>, %95, %cst_29 [1] : vector<8x50xf32> to vector<8xf32>
    %97 = vector.shape_cast %96 : vector<8xf32> to vector<8x1xf32>
    %98 = vector.broadcast %97 : vector<8x1xf32> to vector<8x50xf32>
    %99 = arith.subf %95, %98 : vector<8x50xf32>
    %100 = math.exp %99 : vector<8x50xf32>
    %cst_30 = arith.constant dense<0.000000e+00> : vector<8xf32>
    %101 = vector.multi_reduction <add>, %100, %cst_30 [1] : vector<8x50xf32> to vector<8xf32>
    %102 = vector.shape_cast %101 : vector<8xf32> to vector<8x1xf32>
    %103 = math.log %102 : vector<8x1xf32>
    %104 = arith.addf %103, %97 : vector<8x1xf32>
    %cst_31 = arith.constant 0.000000e+00 : f32
    %105 = vector.broadcast %cst_31 : f32 to vector<8x50xf32>
    %106 = arith.select %9, %95, %105 : vector<8x50xi1>, vector<8x50xf32>
    %cst_32 = arith.constant dense<0.000000e+00> : vector<8xf32>
    %107 = vector.multi_reduction <add>, %106, %cst_32 [1] : vector<8x50xf32> to vector<8xf32>
    %108 = vector.shape_cast %107 : vector<8xf32> to vector<8x1xf32>
    %109 = arith.subf %104, %108 : vector<8x1xf32>
    %cst_33 = arith.constant 0.000000e+00 : f32
    %110 = vector.broadcast %cst_33 : f32 to vector<8x1xf32>
    %111 = arith.select %15, %109, %110 : vector<8x1xi1>, vector<8x1xf32>
    %cst_34 = arith.constant dense<0.000000e+00> : vector<1xf32>
    %112 = vector.multi_reduction <add>, %111, %cst_34 [0] : vector<8x1xf32> to vector<1xf32>
    %113 = vector.shape_cast %112 : vector<1xf32> to vector<1x1xf32>
    %c2_i32 = arith.constant 2 : i32
    %114 = vector.broadcast %c2_i32 : i32 to vector<1x128xi32>
    %115 = arith.cmpi eq, %74, %114 : vector<1x128xi32>
    %cst_35 = arith.constant 0.000000e+00 : f32
    %116 = vector.shape_cast %113 : vector<1x1xf32> to vector<1x1xf32>
    %117 = vector.broadcast %116 : vector<1x1xf32> to vector<1x128xf32>
    %118 = vector.broadcast %cst_35 : f32 to vector<1x128xf32>
    %119 = arith.select %115, %117, %118 : vector<1x128xi1>, vector<1x128xf32>
    %120 = arith.addf %94, %119 : vector<1x128xf32>
    %c0_36 = arith.constant 0 : index
    %c0_37 = arith.constant 0 : index
    %c0_38 = arith.constant 0 : index
    %121 = vector.load %arg6[%c0_36, %c0_37, %c0_38] : memref<1x1x128xf32, #tpu.memory_space<vmem>>, vector<1x1x128xf32>
    %122 = vector.shape_cast %121 : vector<1x1x128xf32> to vector<1x128xf32>
    %123 = vector.shape_cast %120 : vector<1x128xf32> to vector<1x1x128xf32>
    tpu.vector_store %arg6[%c0_36, %c0_37, %c0_38], %123 {strides = array<i32>} : memref<1x1x128xf32, #tpu.memory_space<vmem>>, vector<1x1x128xf32>,
    return
  }
  func.func @transform_0(%arg0: i32) -> (i32, i32) {
    %c0_i32 = arith.constant 0 : i32
    %c0_i32_0 = arith.constant 0 : i32
    %c0_i32_1 = arith.constant 0 : i32
    return %c0_i32, %c0_i32_0 : i32, i32
  }
  func.func @transform_1(%arg0: i32) -> (i32, i32) {
    %c0_i32 = arith.constant 0 : i32
    %c0_i32_0 = arith.constant 0 : i32
    return %arg0, %c0_i32 : i32, i32
  }
  func.func @transform_2(%arg0: i32) -> (i32, i32) {
    %c0_i32 = arith.constant 0 : i32
    %c0_i32_0 = arith.constant 0 : i32
    return %arg0, %c0_i32 : i32, i32
  }
  func.func @transform_3(%arg0: i32) -> (i32, i32) {
    %c0_i32 = arith.constant 0 : i32
    %c0_i32_0 = arith.constant 0 : i32
    return %arg0, %c0_i32 : i32, i32
  }
  func.func @transform_4(%arg0: i32) -> (i32, i32) {
    %c0_i32 = arith.constant 0 : i32
    %c0_i32_0 = arith.constant 0 : i32
    return %arg0, %c0_i32 : i32, i32
  }
  func.func @transform_5(%arg0: i32) -> (i32, i32, i32) {
    %c0_i32 = arith.constant 0 : i32
    %c0_i32_0 = arith.constant 0 : i32
    %c0_i32_1 = arith.constant 0 : i32
    return %arg0, %c0_i32, %c0_i32_0 : i32, i32, i32
  }
}

</mosaic_0001>

<llo_original>
// kernel: tpu_custom_call.1
$region0: #{tpu_custom_call.1}
  #allocation0 [shape = 'u32[]', space=smem, size = 0x4, offset = 0x4, fixed_abs, tag = 'smem constant byte address 0x4 - core index']
  #allocation1 [shape = 'u32[144,128]{1,0:T(1,128)}', space=vmem, size = 0x12000, scoped, tag = 'internal scratch']
  %s0 = inlined_call_operand.vmem [shape: s32[24,1], index: 0, kind: input, shape index: {}]
  %s1 = inlined_call_operand.vmem [shape: f32[20,50], index: 1, kind: input, shape index: {}]
  %s2 = inlined_call_operand.hbm [shape: f32[20,50], index: 2, kind: input, shape index: {}]
  %s3 = inlined_call_operand.hbm [shape: f32[20,50], index: 3, kind: input, shape index: {}]
  %s4 = inlined_call_operand.hbm [shape: f32[20,50], index: 4, kind: input, shape index: {}]
  %s5 = inlined_call_operand.hbm [shape: f32[3,1,128], index: 5, kind: output, shape index: {}]
  %s6 = sld [smem:[#allocation0]]
  $region65: #{tpu_custom_call.1} parent=0
    _
  %s8 = ssub.s32 1, %s6
  %s9 = scalar_select 0, %s8, %s6
  $region1: #{tpu_custom_call.1} parent=0
    #allocation2 [shape = 'u8[8192]{0}', space=vmem, size = 0x2000, scoped, tag = 'input window, operand 2']
    #allocation3 [shape = 's32[2]{0}', space=sflag, size = 0x8, scoped, tag = 'scoped memory for tpu_custom_call.1']
    #allocation4 [shape = 's32[2]{0}', space=sflag, size = 0x8, scoped, tag = 'scoped memory for tpu_custom_call.1']
    #allocation5 [shape = 'u8[8192]{0}', space=vmem, size = 0x2000, scoped, tag = 'input window, operand 3']
    #allocation6 [shape = 's32[2]{0}', space=sflag, size = 0x8, scoped, tag = 'scoped memory for tpu_custom_call.1']
    #allocation7 [shape = 'u8[8192]{0}', space=vmem, size = 0x2000, scoped, tag = 'input window, operand 4']
    #allocation8 [shape = 'u8[1024]{0}', space=vmem, size = 0x400, scoped, tag = 'output window, operand 0']
    %10 = vsyncpa [#allocation3], 0
    %s11 = scalar_lea.sflag [#allocation3], 1
    %12 = vsyncpa %s11, 0
    %13 = vsyncpa [#allocation6], 0
    %s14 = scalar_lea.sflag [#allocation6], 1
    %15 = vsyncpa %s14, 0
    %16 = vsyncpa [#allocation4], 0
    %s17 = scalar_lea.sflag [#allocation4], 1
    %18 = vsyncpa %s17, 0
    loop: start=0, step=1, limit=5
    $region2: #{tpu_custom_call.1} parent=1 // loop_pre_header
      _
    $region3: #{tpu_custom_call.1} parent=1 // loop_header
      %s20 = sphi 0, %s24
      %p21 = scmp.ge.s32.totalorder %s20, 5
      %s28 = sphi 0, %s28
      %s30 = sphi 0, %s28
      %s31 = sphi 0, %s30
      %s45 = sphi 0, %s31
      %s51 = sphi 0, %s53
      %s54 = sphi 0, %s51
      %s55 = sphi 0, %s54
      %s71 = sphi 0, %s55
      %s77 = sphi 0, %s79
      %s80 = sphi 0, %s77
      %s81 = sphi 0, %s80
      %s97 = sphi 0, %s81
      %s103 = sphi 0, %s105
      %s106 = sphi 0, %s103
      %s107 = sphi 0, %s106
      %s123 = sphi 0, %s107
      %s129 = sphi 0, %s131
      %s132 = sphi 0, %s129
      %s133 = sphi 0, %s132
      %s149 = sphi 0, %s133
      %s155 = sphi 0, %s157
      %s158 = sphi 0, %s155
      %s159 = sphi 0, %s158
      %s175 = sphi 0, %s159
    $region4: #{tpu_custom_call.1} parent=1 // loop_header_branch
      %23 = sbr.rel (%p21) target = $region8
    $region5: #{tpu_custom_call.1} parent=1 // loop_body
      %s25 = ssub.s32 %s20, 1
      %s26 = ssub.s32 %s20, 2
      %s27 = sadd.s32 %s20, 1
      %s29 = sadd.s32 %s28, 1
      %p32 = scmp.eq.s32.totalorder %s20, 2
      %p33 = scmp.ne.s32.totalorder %s28, %s30
      %p34 = scmp.eq.s32.totalorder %s20, 0
      %p35 = por %p33, %p34
      %p36 = scmp.ne.s32.totalorder %s28, %s30
      %p37 = scmp.eq.s32.totalorder %s25, 2
      %p38 = por %p36, %p37
      %p39 = scmp.ne.s32.totalorder %s30, %s31
      %p40 = scmp.eq.s32.totalorder %s25, 0
      %p41 = por %p39, %p40
      %p42 = scmp.ne.s32.totalorder %s30, %s31
      %p43 = scmp.eq.s32.totalorder %s26, 2
      %p44 = por %p42, %p43
      %p46 = scmp.ne.s32.totalorder %s31, %s45
      %p47 = scmp.eq.s32.totalorder %s26, 0
      %p48 = por %p46, %p47
      %s49 = ssub.s32 %s20, %s27
      %p50 = scmp.eq.s32.totalorder %s49, 0
      %s52 = sadd.s32 %s51, 1
      %s53 = scalar_select %p50, %s51, %s52
      %p56 = pneg %p50
      %p57 = scmp.eq.s32.totalorder %s20, 2
      %p58 = por %p56, %p57
      %p59 = scmp.ne.s32.totalorder %s51, %s54
      %p60 = scmp.eq.s32.totalorder %s20, 0
      %p61 = por %p59, %p60
      %p62 = scmp.ne.s32.totalorder %s51, %s54
      %p63 = scmp.eq.s32.totalorder %s25, 2
      %p64 = por %p62, %p63
      %p65 = scmp.ne.s32.totalorder %s54, %s55
      %p66 = scmp.eq.s32.totalorder %s25, 0
      %p67 = por %p65, %p66
      %p68 = scmp.ne.s32.totalorder %s54, %s55
      %p69 = scmp.eq.s32.totalorder %s26, 2
      %p70 = por %p68, %p69
      %p72 = scmp.ne.s32.totalorder %s55, %s71
      %p73 = scmp.eq.s32.totalorder %s26, 0
      %p74 = por %p72, %p73
      %s75 = ssub.s32 %s20, %s27
      %p76 = scmp.eq.s32.totalorder %s75, 0
      %s78 = sadd.s32 %s77, 1
      %s79 = scalar_select %p76, %s77, %s78
      %p82 = pneg %p76
      %p83 = scmp.eq.s32.totalorder %s20, 2
      %p84 = por %p82, %p83
      %p85 = scmp.ne.s32.totalorder %s77, %s80
      %p86 = scmp.eq.s32.totalorder %s20, 0
      %p87 = por %p85, %p86
      %p88 = scmp.ne.s32.totalorder %s77, %s80
      %p89 = scmp.eq.s32.totalorder %s25, 2
      %p90 = por %p88, %p89
      %p91 = scmp.ne.s32.totalorder %s80, %s81
      %p92 = scmp.eq.s32.totalorder %s25, 0
      %p93 = por %p91, %p92
      %p94 = scmp.ne.s32.totalorder %s80, %s81
      %p95 = scmp.eq.s32.totalorder %s26, 2
      %p96 = por %p94, %p95
      %p98 = scmp.ne.s32.totalorder %s81, %s97
      %p99 = scmp.eq.s32.totalorder %s26, 0
      %p100 = por %p98, %p99
      %s101 = ssub.s32 %s20, %s27
      %p102 = scmp.eq.s32.totalorder %s101, 0
      %s104 = sadd.s32 %s103, 1
      %s105 = scalar_select %p102, %s103, %s104
      %p108 = pneg %p102
      %p109 = scmp.eq.s32.totalorder %s20, 2
      %p110 = por %p108, %p109
      %p111 = scmp.ne.s32.totalorder %s103, %s106
      %p112 = scmp.eq.s32.totalorder %s20, 0
      %p113 = por %p111, %p112
      %p114 = scmp.ne.s32.totalorder %s103, %s106
      %p115 = scmp.eq.s32.totalorder %s25, 2
      %p116 = por %p114, %p115
      %p117 = scmp.ne.s32.totalorder %s106, %s107
      %p118 = scmp.eq.s32.totalorder %s25, 0
      %p119 = por %p117, %p118
      %p120 = scmp.ne.s32.totalorder %s106, %s107
      %p121 = scmp.eq.s32.totalorder %s26, 2
      %p122 = por %p120, %p121
      %p124 = scmp.ne.s32.totalorder %s107, %s123
      %p125 = scmp.eq.s32.totalorder %s26, 0
      %p126 = por %p124, %p125
      %s127 = ssub.s32 %s20, %s27
      %p128 = scmp.eq.s32.totalorder %s127, 0
      %s130 = sadd.s32 %s129, 1
      %s131 = scalar_select %p128, %s129, %s130
      %p134 = pneg %p128
      %p135 = scmp.eq.s32.totalorder %s20, 2
      %p136 = por %p134, %p135
      %p137 = scmp.ne.s32.totalorder %s129, %s132
      %p138 = scmp.eq.s32.totalorder %s20, 0
      %p139 = por %p137, %p138
      %p140 = scmp.ne.s32.totalorder %s129, %s132
      %p141 = scmp.eq.s32.totalorder %s25, 2
      %p142 = por %p140, %p141
      %p143 = scmp.ne.s32.totalorder %s132, %s133
      %p144 = scmp.eq.s32.totalorder %s25, 0
      %p145 = por %p143, %p144
      %p146 = scmp.ne.s32.totalorder %s132, %s133
      %p147 = scmp.eq.s32.totalorder %s26, 2
      %p148 = por %p146, %p147
      %p150 = scmp.ne.s32.totalorder %s133, %s149
      %p151 = scmp.eq.s32.totalorder %s26, 0
      %p152 = por %p150, %p151
      %s153 = ssub.s32 %s20, %s27
      %p154 = scmp.eq.s32.totalorder %s153, 0
      %s156 = sadd.s32 %s155, 1
      %s157 = scalar_select %p154, %s155, %s156
      %p160 = pneg %p154
      %p161 = scmp.eq.s32.totalorder %s20, 2
      %p162 = por %p160, %p161
      %p163 = scmp.ne.s32.totalorder %s155, %s158
      %p164 = scmp.eq.s32.totalorder %s20, 0
      %p165 = por %p163, %p164
      %p166 = scmp.ne.s32.totalorder %s155, %s158
      %p167 = scmp.eq.s32.totalorder %s25, 2
      %p168 = por %p166, %p167
      %p169 = scmp.ne.s32.totalorder %s158, %s159
      %p170 = scmp.eq.s32.totalorder %s25, 0
      %p171 = por %p169, %p170
      %p172 = scmp.ne.s32.totalorder %s158, %s159
      %p173 = scmp.eq.s32.totalorder %s26, 2
      %p174 = por %p172, %p173
      %p176 = scmp.ne.s32.totalorder %s159, %s175
      %p177 = scmp.eq.s32.totalorder %s26, 0
      %p178 = por %p176, %p177
      %p179 = scmp.le.s32.totalorder 1, %s20
      %p180 = scmp.lt.s32.totalorder %s20, 4
      %p181 = pnand %p179, %p180
      %p182 = pneg %p181
      // Predicated region
      $region9: #{tpu_custom_call.1} parent=5 // pred_check
        _
      $region10: #{tpu_custom_call.1} parent=5 // pred_check_branch
        %184 = sbr.rel (%p181) target = $region12
      $region11: #{tpu_custom_call.1} parent=5 // pred_region
        %s185 = ssub.s32 %s20, 1
        // Predicated region
        $region13: #{tpu_custom_call.1} parent=11 // pred_check
          %p186 = pneg %p41
        $region14: #{tpu_custom_call.1} parent=11 // pred_check_branch
          %188 = sbr.rel (%p186) target = $region16
        $region15: #{tpu_custom_call.1} parent=11 // pred_region
          _
        $region16: #{tpu_custom_call.1} parent=11 // pred_fallthru
          _
      $region12: #{tpu_custom_call.1} parent=5 // pred_fallthru
        _
      %p189 = scmp.lt.s32.totalorder %s20, 3
      // Predicated region
      $region17: #{tpu_custom_call.1} parent=5 // pred_check
        %p190 = pneg %p189
      $region18: #{tpu_custom_call.1} parent=5 // pred_check_branch
        %192 = sbr.rel (%p190) target = $region20
      $region19: #{tpu_custom_call.1} parent=5 // pred_region
        // Predicated region
        $region21: #{tpu_custom_call.1} parent=19 // pred_check
          %p193 = pneg %p61
        $region22: #{tpu_custom_call.1} parent=19 // pred_check_branch
          %195 = sbr.rel (%p193) target = $region24
        $region23: #{tpu_custom_call.1} parent=19 // pred_region
          %p196 = scmp.lt.s32.totalorder %s20, 2
          %s197 = scalar_select %p196, %s20, 2
          %s198 = smul.addr %s197, 8
          %s199 = scalar_lea.vmem %s1, %s198
        $region24: #{tpu_custom_call.1} parent=19 // pred_fallthru
          _
        // Predicated region
        $region25: #{tpu_custom_call.1} parent=19 // pred_check
          %p200 = pneg %p87
        $region26: #{tpu_custom_call.1} parent=19 // pred_check_branch
          %202 = sbr.rel (%p200) target = $region28
        $region27: #{tpu_custom_call.1} parent=19 // pred_region
          %s203 = sand.u32 %s77, 1
          %s204 = scalar_lea.sflag [#allocation3], %s203
          %s205 = sand.u32 %s77, 1
          %s206 = smul.addr %s205, 8
          %s207 = scalar_lea.vmem [#allocation2], %s206
          %s209 = ssub.s32 128, 128
          %210 = vsyncadd %s204, %s209
          %s211 = smul.addr %s20, 128
          %s212 = scalar_lea.hbm %s2, %s211
          %s214 = sshll.u32 %s207, 4
          %s215 = int_to_ptr.vmem [resolvable:$true] %s214
          %217 = dma.hbm_to_vmem [thread:$0]  %s212, 128, %s215, %s204
        $region28: #{tpu_custom_call.1} parent=19 // pred_fallthru
          _
        // Predicated region
        $region29: #{tpu_custom_call.1} parent=19 // pred_check
          %p218 = pneg %p113
        $region30: #{tpu_custom_call.1} parent=19 // pred_check_branch
          %220 = sbr.rel (%p218) target = $region32
        $region31: #{tpu_custom_call.1} parent=19 // pred_region
          %s221 = sand.u32 %s20, 1
          %s222 = scalar_lea.sflag [#allocation6], %s221
          %s223 = sand.u32 %s103, 1
          %s224 = smul.addr %s223, 8
          %s225 = scalar_lea.vmem [#allocation5], %s224
          %s227 = ssub.s32 128, 128
          %228 = vsyncadd %s222, %s227
          %s229 = smul.addr %s20, 128
          %s230 = scalar_lea.hbm %s3, %s229
          %s232 = sshll.u32 %s225, 4
          %s233 = int_to_ptr.vmem [resolvable:$true] %s232
          %235 = dma.hbm_to_vmem [thread:$0]  %s230, 128, %s233, %s222
        $region32: #{tpu_custom_call.1} parent=19 // pred_fallthru
          _
        // Predicated region
        $region33: #{tpu_custom_call.1} parent=19 // pred_check
          %p236 = pneg %p139
        $region34: #{tpu_custom_call.1} parent=19 // pred_check_branch
          %238 = sbr.rel (%p236) target = $region36
        $region35: #{tpu_custom_call.1} parent=19 // pred_region
          %s239 = sand.u32 %s20, 1
          %s240 = scalar_lea.sflag [#allocation6], %s239
          %s241 = sand.u32 %s129, 1
          %s242 = smul.addr %s241, 8
          %s243 = scalar_lea.vmem [#allocation7], %s242
          %s245 = ssub.s32 128, 128
          %246 = vsyncadd %s240, %s245
          %s247 = smul.addr %s20, 128
          %s248 = scalar_lea.hbm %s4, %s247
          %s250 = sshll.u32 %s243, 4
          %s251 = int_to_ptr.vmem [resolvable:$true] %s250
          %253 = dma.hbm_to_vmem [thread:$0]  %s248, 128, %s251, %s240
        $region36: #{tpu_custom_call.1} parent=19 // pred_fallthru
          _
      $region20: #{tpu_custom_call.1} parent=5 // pred_fallthru
        _
      %p254 = scmp.le.s32.totalorder 1, %s20
      %p255 = scmp.lt.s32.totalorder %s20, 4
      %p256 = pnand %p254, %p255
      %p257 = pneg %p256
      // Predicated region
      $region37: #{tpu_custom_call.1} parent=5 // pred_check
        _
      $region38: #{tpu_custom_call.1} parent=5 // pred_check_branch
        %259 = sbr.rel (%p256) target = $region40
      $region39: #{tpu_custom_call.1} parent=5 // pred_region
        %s260 = ssub.s32 %s20, 1
        %s261 = sand.u32 %s80, 1
        %s262 = scalar_lea.sflag [#allocation3], %s261
        %s263 = sand.u32 %s80, 1
        %s264 = smul.addr %s263, 8
        %s265 = scalar_lea.vmem [#allocation2], %s264
        // Predicated region
        $region41: #{tpu_custom_call.1} parent=39 // pred_check
          %p266 = pneg %p93
        $region42: #{tpu_custom_call.1} parent=39 // pred_check_branch
          %268 = sbr.rel (%p266) target = $region44
        $region43: #{tpu_custom_call.1} parent=39 // pred_region
          %269 = dma.done %s262, 128
        $region44: #{tpu_custom_call.1} parent=39 // pred_fallthru
          _
        %s270 = sand.u32 %s25, 1
        %s271 = scalar_lea.sflag [#allocation6], %s270
        %s272 = sand.u32 %s106, 1
        %s273 = smul.addr %s272, 8
        %s274 = scalar_lea.vmem [#allocation5], %s273
        // Predicated region
        $region45: #{tpu_custom_call.1} parent=39 // pred_check
          %p275 = pneg %p119
        $region46: #{tpu_custom_call.1} parent=39 // pred_check_branch
          %277 = sbr.rel (%p275) target = $region48
        $region47: #{tpu_custom_call.1} parent=39 // pred_region
          %278 = dma.done %s271, 128
        $region48: #{tpu_custom_call.1} parent=39 // pred_fallthru
          _
        %s279 = sand.u32 %s25, 1
        %s280 = scalar_lea.sflag [#allocation6], %s279
        %s281 = sand.u32 %s132, 1
        %s282 = smul.addr %s281, 8
        %s283 = scalar_lea.vmem [#allocation7], %s282
        // Predicated region
        $region49: #{tpu_custom_call.1} parent=39 // pred_check
          %p284 = pneg %p145
        $region50: #{tpu_custom_call.1} parent=39 // pred_check_branch
          %286 = sbr.rel (%p284) target = $region52
        $region51: #{tpu_custom_call.1} parent=39 // pred_region
          %287 = dma.done %s280, 128
        $region52: #{tpu_custom_call.1} parent=39 // pred_fallthru
          _
        %p288 = pneg %p41
        %p289 = pneg %p38
        %p290 = scmp.lt.s32.totalorder %s25, 2
        %s291 = scalar_select %p290, %s25, 2
        %s292 = smul.addr %s291, 8
        %s293 = scalar_lea.vmem %s1, %s292
        %p294 = pneg %p67
        %p295 = pneg %p64
        %s296 = sand.u32 %s80, 1
        %s297 = scalar_lea.sflag [#allocation3], %s296
        %s298 = sand.u32 %s80, 1
        %s299 = smul.addr %s298, 8
        %s300 = scalar_lea.vmem [#allocation2], %s299
        %p301 = pneg %p93
        %p302 = pneg %p90
        %s303 = sand.u32 %s25, 1
        %s304 = scalar_lea.sflag [#allocation6], %s303
        %s305 = sand.u32 %s106, 1
        %s306 = smul.addr %s305, 8
        %s307 = scalar_lea.vmem [#allocation5], %s306
        %p308 = pneg %p119
        %p309 = pneg %p116
        %s310 = sand.u32 %s25, 1
        %s311 = scalar_lea.sflag [#allocation6], %s310
        %s312 = sand.u32 %s132, 1
        %s313 = smul.addr %s312, 8
        %s314 = scalar_lea.vmem [#allocation7], %s313
        %p315 = pneg %p145
        %p316 = pneg %p142
        %p317 = pneg %p171
        %p318 = pneg %p168
        %s319 = sand.u32 %s158, 1
        %s320 = scalar_lea.sflag [#allocation4], %s319
        %s321 = sand.u32 %s158, 1
        %s322 = scalar_lea.vmem [#allocation8], %s321
        %p323 = scmp.lt.s32.totalorder %s25, 2
        %s324 = scalar_select %p323, %s25, 2
        %s325 = smul.addr %s324, 8
        %s326 = scalar_lea.vmem %s1, %s325
        %s327 = smul.u32 %s25, 8
        %s328 = scalar_lea.vmem %s0, %s327
        %v329 = vld [vmem:[%s328] sm:$0xff]
        %v330 = vld [vmem:[%s326] sm:$0xff]
        %v331 = vld [vmem:[%s265] sm:$0xff]
        %v332 = vld [vmem:[%s283] sm:$0xff]
        %v333 = vlaneseq
        %v334 = vand.u32 %v333, 127
        %335 = vset.pattern.permute.xlu0 0
        %336 = vperm.xlu0 %335, %v329
        %v337 = vpop.permute.xlu0 %336
        %vm338 = vcmp.eq.s32.totalorder %v334, %v337
        %v339 = vlaneseq
        %v340 = vshrl.u32 %v339, 7
        %v341 = vstv %s327
        %v342 = vadd.s32 %v340, %v341
        %vm343 = vcmp.lt.s32.totalorder %v342, 20
        %vm344 = vcmask 408576
        %v345 = vsel %vm344, %v330, -inf
        %346 = vmax.xlane.f32.xlu0 %v345
        %v347 = vpop.xlane.xlu0 %346
        %v348 = vsub.f32 %v330, %v347
        %v349 = vmul.f32 %v348, 1.442695
        %v350 = vpow.pop %v349
        %v351 = vsel %vm344, %v350, 0.0
        %352 = vadd.xlane.f32.xlu0 %v351
        %v353 = vpop.xlane.xlu0 %352
        %v354 = vlog2.pop %v353
        %v355 = vmul.f32 %v354, 0.6931472
        %v356 = vadd.f32 %v355, %v347
        %v357 = vsel %vm338, %v330, 0.0
        %v358 = vsel %vm344, %v357, 0.0
        %359 = vadd.xlane.f32.xlu0 %v358
        %v360 = vpop.xlane.xlu0 %359
        %v361 = vsub.f32 %v356, %v360
        %v362 = vsel %vm343, %v361, 0.0
        %v363 = vrcp.pop %v353
        %v364 = vmul.f32 %v350, %v363
        %v365 = vsel %vm344, %v332, -inf
        %366 = vmax.xlane.f32.xlu0 %v365
        %v367 = vpop.xlane.xlu0 %366
        %v368 = vsub.f32 %v332, %v367
        %v369 = vmul.f32 %v368, 1.442695
        %v370 = vpow.pop %v369
        %v371 = vsel %vm344, %v370, 0.0
        %372 = vadd.xlane.f32.xlu0 %v371
        %v373 = vpop.xlane.xlu0 %372
        %v374 = vlog2.pop %v373
        %v375 = vmul.f32 %v374, 0.6931472
        %v376 = vsub.f32 %v368, %v375
        %v377 = vsub.f32 0.0, %v364
        %v378 = vmul.f32 %v377, %v376
        %v379 = vsel %vm344, %v378, 0.0
        %380 = vadd.xlane.f32.xlu0 %v379
        %v381 = vpop.xlane.xlu0 %380
        %v382 = vsel %vm343, %v381, 0.0
        %v383 = vsel %vm344, %v331, -inf
        %384 = vmax.xlane.f32.xlu0 %v383
        %v385 = vpop.xlane.xlu0 %384
        %v386 = vsub.f32 %v331, %v385
        %v387 = vmul.f32 %v386, 1.442695
        %v388 = vpow.pop %v387
        %v389 = vsel %vm344, %v388, 0.0
        %390 = vadd.xlane.f32.xlu0 %v389
        %v391 = vpop.xlane.xlu0 %390
        %v392 = vlog2.pop %v391
        %v393 = vmul.f32 %v392, 0.6931472
        %v394 = vadd.f32 %v393, %v385
        %v395 = vsel %vm338, %v331, 0.0
        %v396 = vsel %vm344, %v395, 0.0
        %397 = vadd.xlane.f32.xlu0 %v396
        %v398 = vpop.xlane.xlu0 %397
        %v399 = vsub.f32 %v394, %v398
        %v400 = vsel %vm343, %v399, 0.0
        %v401 = vrot.slane %v362, 4
        %v402 = vadd.f32 %v362, %v401
        %v403 = vrot.slane %v402, 2
        %v404 = vadd.f32 %v402, %v403
        %v405 = vrot.slane %v404, 1
        %v406 = vadd.f32 %v404, %v405
        %v407 = vrot.slane %v400, 4
        %v408 = vadd.f32 %v400, %v407
        %v409 = vrot.slane %v408, 2
        %v410 = vadd.f32 %v408, %v409
        %v411 = vrot.slane %v410, 1
        %v412 = vadd.f32 %v410, %v411
        %v413 = vrot.slane %v382, 4
        %v414 = vadd.f32 %v382, %v413
        %v415 = vrot.slane %v414, 2
        %v416 = vadd.f32 %v414, %v415
        %v417 = vrot.slane %v416, 1
        %v418 = vadd.f32 %v416, %v417
        %vm419 = vcmp.eq.s32.totalorder %v334, 0
        %v420 = vsel %vm419, %v406, 0.0
        %vm421 = vcmp.eq.s32.totalorder %v334, 1
        %v422 = vsel %vm421, %v412, 0.0
        %v423 = vadd.f32 %v420, %v422
        %vm424 = vcmp.eq.s32.totalorder %v334, 3
        %v425 = vsel %vm424, %v418, 0.0
        %v426 = vadd.f32 %v423, %v425
        %v427 = vld [vmem:[%s274] sm:$0xff]
        %v428 = vsel %vm344, %v427, -inf
        %429 = vmax.xlane.f32.xlu0 %v428
        %v430 = vpop.xlane.xlu0 %429
        %v431 = vsub.f32 %v427, %v430
        %v432 = vmul.f32 %v431, 1.442695
        %v433 = vpow.pop %v432
        %v434 = vsel %vm344, %v433, 0.0
        %435 = vadd.xlane.f32.xlu0 %v434
        %v436 = vpop.xlane.xlu0 %435
        %v437 = vlog2.pop %v436
        %v438 = vmul.f32 %v437, 0.6931472
        %v439 = vadd.f32 %v438, %v430
        %v440 = vsel %vm338, %v427, 0.0
        %v441 = vsel %vm344, %v440, 0.0
        %442 = vadd.xlane.f32.xlu0 %v441
        %v443 = vpop.xlane.xlu0 %442
        %v444 = vsub.f32 %v439, %v443
        %v445 = vsel %vm343, %v444, 0.0
        %v446 = vrot.slane %v445, 4
        %v447 = vadd.f32 %v445, %v446
        %v448 = vrot.slane %v447, 2
        %v449 = vadd.f32 %v447, %v448
        %v450 = vrot.slane %v449, 1
        %v451 = vadd.f32 %v449, %v450
        %vm452 = vcmp.eq.s32.totalorder %v334, 2
        %v453 = vsel %vm452, %v451, 0.0
        %v454 = vadd.f32 %v426, %v453
        %455 = vst [vmem:[%s322] sm:$0x1] %v454
        %s456 = sand.u32 %s158, 1
        %s457 = scalar_lea.sflag [#allocation4], %s456
        %s458 = sand.u32 %s158, 1
        %s459 = scalar_lea.vmem [#allocation8], %s458
        // Predicated region
        $region53: #{tpu_custom_call.1} parent=39 // pred_check
          %p460 = pneg %p168
        $region54: #{tpu_custom_call.1} parent=39 // pred_check_branch
          %462 = sbr.rel (%p460) target = $region56
        $region55: #{tpu_custom_call.1} parent=39 // pred_region
          %s464 = ssub.s32 16, 16
          %465 = vsyncadd %s457, %s464
          %s466 = smul.addr %s25, 16
          %s467 = scalar_lea.hbm %s5, %s466
          %s469 = sshll.u32 %s459, 4
          %s470 = int_to_ptr.vmem [resolvable:$true] %s469
          %472 = dma.vmem_to_hbm [thread:$0]  %s470, 16, %s467, %s457
        $region56: #{tpu_custom_call.1} parent=39 // pred_fallthru
          _
      $region40: #{tpu_custom_call.1} parent=5 // pred_fallthru
        _
      %p473 = scmp.le.s32.totalorder 2, %s20
      // Predicated region
      $region57: #{tpu_custom_call.1} parent=5 // pred_check
        %p474 = pneg %p473
      $region58: #{tpu_custom_call.1} parent=5 // pred_check_branch
        %476 = sbr.rel (%p474) target = $region60
      $region59: #{tpu_custom_call.1} parent=5 // pred_region
        %s477 = ssub.s32 %s20, 2
        // Predicated region
        $region61: #{tpu_custom_call.1} parent=59 // pred_check
          %p478 = pneg %p174
        $region62: #{tpu_custom_call.1} parent=59 // pred_check_branch
          %480 = sbr.rel (%p478) target = $region64
        $region63: #{tpu_custom_call.1} parent=59 // pred_region
          %s481 = sand.u32 %s159, 1
          %s482 = scalar_lea.sflag [#allocation4], %s481
          %s483 = sand.u32 %s159, 1
          %s484 = scalar_lea.vmem [#allocation8], %s483
          %485 = dma.done %s482, 16
        $region64: #{tpu_custom_call.1} parent=59 // pred_fallthru
          _
      $region60: #{tpu_custom_call.1} parent=5 // pred_fallthru
        _
    $region6: #{tpu_custom_call.1} parent=1 // loop_footer
      %s24 = sadd.s32 1, %s20
    $region7: #{tpu_custom_call.1} parent=1 // loop_footer_branch
      %19 = sbr.rel target = $region3
    $region8: #{tpu_custom_call.1} parent=1 // loop_exit
      _
    %486 = vsyncpa [#allocation3], 1
    %s487 = scalar_lea.sflag [#allocation3], 1
    %488 = vsyncpa %s487, 1
    %489 = vsyncpa [#allocation6], 1
    %s490 = scalar_lea.sflag [#allocation6], 1
    %491 = vsyncpa %s490, 1
    %492 = vsyncpa [#allocation4], 1
    %s493 = scalar_lea.sflag [#allocation4], 1
    %494 = vsyncpa %s493, 1

</llo_original>
